<compile_context>
chip_gen: v5e
topology: v5e:2x2
jax: 0.10.0
libtpu: 0.0.40
codegen_flags: <defaults>
</compile_context>

<pallas_src>
import functools

import jax
import jax.numpy as jnp
from jax.experimental import pallas as pl
from jax.experimental.pallas import tpu as pltpu

STATE_DIM = 6
HIDDEN = 128
N_ACTION = 4
K_PAD = 8          # fc1 contraction dim zero-padded 6 -> 8 (sublane aligned)


def _round_up(x, m):
    return ((x + m - 1) // m) * m


def _cdiv(a, b):
    return -(-a // b)


def policy_net_kernel(x_ref, w1_ref, b1_ref, w2_ref, b2_ref, w3_ref, b3_ref,
                      out_ref):
    # fc1 + ReLU : (TB, 8) @ (8, 128) on the MXU (K zero-padded), f32 inputs.
    h1 = jnp.dot(x_ref[...], w1_ref[...], preferred_element_type=jnp.float32)
    h1 = jnp.maximum(h1 + b1_ref[...], 0.0)                     # (TB, 128)

    # fc2 + ReLU : bf16 operands, f32 accumulation (MXU-native path).
    h2 = jnp.dot(h1.astype(jnp.bfloat16), w2_ref[...],
                 preferred_element_type=jnp.float32)
    h2 = jnp.maximum(h2 + b2_ref[...], 0.0)                     # (TB, 128)

    # fc3 : bf16 operands, f32 accumulation.
    scores = jnp.dot(h2.astype(jnp.bfloat16), w3_ref[...],
                     preferred_element_type=jnp.float32)
    scores = scores + b3_ref[...]                               # (TB, 4)

    # Numerically stable softmax over dim=1; exact division so every row sums
    # to 1 up to f32 rounding (the approx reciprocal was not accurate enough).
    m = jnp.max(scores, axis=-1, keepdims=True)
    e = jnp.exp(scores - m)
    denom = jnp.sum(e, axis=-1, keepdims=True)
    out_ref[...] = (e / denom).astype(out_ref.dtype)


@functools.partial(jax.jit, static_argnames=("tile_b",))
def policy_network_forward(x, params, tile_b=1024):
    """x: (B, 6) or (6,) float32.  Returns softmax action probabilities (B, 4)."""
    if x.ndim == 1:                       # mirrors x.unsqueeze(0) in torch
        x = x[None, :]
    w1, b1, w2, b2, w3, b3 = params
    B, state_dim = x.shape
    hidden = w1.shape[1]
    n_action = w3.shape[1]

    # Balanced batch tiles with minimal tail padding; >= 2 tiles when B > 8 so
    # the "parallel" batch axis can shard across both v7x TensorCores.
    num_tiles = max(1, _cdiv(B, tile_b))
    if B > 8:
        num_tiles = max(num_tiles, 2)
    TB = _round_up(_cdiv(B, num_tiles), 8)
    B_pad = TB * num_tiles

    # Zero-pad: tail batch rows (sliced away below) and fc1 K dim 6 -> 8 so the
    # degenerate contraction maps cleanly onto the MXU.
    x_p = jnp.pad(x.astype(jnp.float32),
                  ((0, B_pad - B), (0, K_PAD - state_dim)))
    w1_p = jnp.pad(w1, ((0, K_PAD - state_dim), (0, 0)))

    # bf16 operands for the two 128-wide matmuls (f32 accumulation in-kernel).
    w2_b = w2.astype(jnp.bfloat16)
    w3_b = w3.astype(jnp.bfloat16)

    def resident(a):
        # Same block every grid step -> stays VMEM-resident, no re-DMA.
        return pl.BlockSpec(a.shape, lambda i: (0, 0))

    flops = 2 * B_pad * (K_PAD * hidden + hidden * hidden + hidden * n_action)
    weight_bytes = (int(w1_p.size) + int(b1.size) + int(b2.size)
                    + int(b3.size)) * 4 + (int(w2_b.size) + int(w3_b.size)) * 2
    cost = pl.CostEstimate(
        flops=flops,
        transcendentals=B_pad * n_action,                      # exp
        bytes_accessed=B_pad * (K_PAD + n_action) * 4 + weight_bytes,
    )

    out = pl.pallas_call(
        policy_net_kernel,
        out_shape=jax.ShapeDtypeStruct((B_pad, n_action), jnp.float32),
        grid=(num_tiles,),
        in_specs=[
            pl.BlockSpec((TB, K_PAD), lambda i: (i, 0)),       # streamed x tile
            resident(w1_p), resident(b1),
            resident(w2_b), resident(b2),
            resident(w3_b), resident(b3),
        ],
        out_specs=pl.BlockSpec((TB, n_action), lambda i: (i, 0)),
        compiler_params=pltpu.CompilerParams(
            dimension_semantics=("parallel",)),
        cost_estimate=cost,
    )(x_p, w1_p, b1, w2_b, b2, w3_b, b3)

    return out[:B]


def init_params(key):
    """Deterministic init mimicking torch.nn.Linear default
    (uniform(-1/sqrt(fan_in), 1/sqrt(fan_in)) for weight and bias)."""
    dims = [(STATE_DIM, HIDDEN), (HIDDEN, HIDDEN), (HIDDEN, N_ACTION)]
    params = []
    for (fan_in, fan_out) in dims:
        key, kw, kb = jax.random.split(key, 3)
        bound = 1.0 / jnp.sqrt(float(fan_in))
        w = jax.random.uniform(kw, (fan_in, fan_out), jnp.float32,
                               minval=-bound, maxval=bound)
        b = jax.random.uniform(kb, (1, fan_out), jnp.float32,
                               minval=-bound, maxval=bound)
        params += [w, b]
    return tuple(params)


def reference_forward(x, params):
    """Pure-JAX f32 reference for sanity check."""
    w1, b1, w2, b2, w3, b3 = params
    if x.ndim == 1:
        x = x[None, :]
    h1 = jnp.maximum(x @ w1 + b1, 0.0)
    h2 = jnp.maximum(h1 @ w2 + b2, 0.0)
    s = h2 @ w3 + b3
    return jax.nn.softmax(s, axis=1)


if __name__ == "__main__":
    key = jax.random.PRNGKey(0)
    key, kx, kx2 = jax.random.split(key, 3)
    params = init_params(key)

    # Kernel uses bf16 MXU operands (f32 accumulation), so compare against the
    # pure-f32 reference with a matching tolerance.  Softmax uses exact
    # division, so rows sum to 1 up to f32 rounding.
    ATOL = RTOL = 5e-3
    SUM_ATOL = 1e-5

    # Small batch (single tile).
    batch = 8
    x = jax.random.normal(kx, (batch, 6), jnp.float32)
    probs = jax.block_until_ready(policy_network_forward(x, params))
    ref = reference_forward(x, params)
    assert probs.shape == (batch, 4)
    assert jnp.allclose(jnp.sum(probs, axis=1), 1.0, atol=SUM_ATOL)
    assert jnp.allclose(probs, ref, atol=ATOL, rtol=RTOL)

    # 1-D input path (mirrors torch's unsqueeze(0)).
    p1 = jax.block_until_ready(policy_network_forward(x[0], params))
    assert p1.shape == (1, 4)
    assert jnp.allclose(p1, ref[0:1], atol=ATOL, rtol=RTOL)

    # Larger batch exercising the balanced 2-tile grid + tail padding
    # (B=1000 -> TB=504, B_pad=1008, 8 padded rows sliced away).
    big = 1000
    xb = jax.random.normal(kx2, (big, 6), jnp.float32)
    pb = jax.block_until_ready(policy_network_forward(xb, params))
    refb = reference_forward(xb, params)
    assert pb.shape == (big, 4)
    assert jnp.allclose(jnp.sum(pb, axis=1), 1.0, atol=SUM_ATOL)
    assert jnp.allclose(pb, refb, atol=ATOL, rtol=RTOL)

    print("KERNEL_OK")
</pallas_src>

<mosaic_0001>
module attributes {stable_mosaic.version = 11 : i64} {
  func.func @policy_net_kernel(%arg0: i32, %arg1: memref<8x8xf32, #tpu.memory_space<vmem>>, %arg2: memref<8x128xf32, #tpu.memory_space<vmem>>, %arg3: memref<1x128xf32, #tpu.memory_space<vmem>>, %arg4: memref<128x128xbf16, #tpu.memory_space<vmem>>, %arg5: memref<1x128xf32, #tpu.memory_space<vmem>>, %arg6: memref<128x4xbf16, #tpu.memory_space<vmem>>, %arg7: memref<1x4xf32, #tpu.memory_space<vmem>>, %arg8: memref<8x4xf32, #tpu.memory_space<vmem>>) attributes {dimension_semantics = [#tpu.dimension_semantics<parallel>], iteration_bounds = array<i64: 1>, scalar_prefetch = 0 : i64, scratch_operands = 0 : i64, tpu.core_type = #tpu.core_type<tc>, window_params = [{transform_indices = @transform_0, window_bounds = array<i64: 8, 8>}, {pipeline_mode = #tpu.pipeline_mode<synchronous>, transform_indices = @transform_1, window_bounds = array<i64: 8, 128>}, {pipeline_mode = #tpu.pipeline_mode<synchronous>, transform_indices = @transform_2, window_bounds = array<i64: 1, 128>}, {pipeline_mode = #tpu.pipeline_mode<synchronous>, transform_indices = @transform_3, window_bounds = array<i64: 128, 128>}, {pipeline_mode = #tpu.pipeline_mode<synchronous>, transform_indices = @transform_4, window_bounds = array<i64: 1, 128>}, {pipeline_mode = #tpu.pipeline_mode<synchronous>, transform_indices = @transform_5, window_bounds = array<i64: 128, 4>}, {pipeline_mode = #tpu.pipeline_mode<synchronous>, transform_indices = @transform_6, window_bounds = array<i64: 1, 4>}, {transform_indices = @transform_7, window_bounds = array<i64: 8, 4>}]} {
    %c0 = arith.constant 0 : index
    %c0_0 = arith.constant 0 : index
    %0 = vector.load %arg1[%c0, %c0_0] : memref<8x8xf32, #tpu.memory_space<vmem>>, vector<8x8xf32>
    %c0_1 = arith.constant 0 : index
    %c0_2 = arith.constant 0 : index
    %1 = vector.load %arg2[%c0_1, %c0_2] : memref<8x128xf32, #tpu.memory_space<vmem>>, vector<8x128xf32>
    %cst = arith.constant dense<0.000000e+00> : vector<8x128xf32>
    %2 = tpu.matmul %0, %1, %cst {dimension_numbers = #tpu.dot_dimension_numbers<[1], [0], [0], [1], [0, 0, 1, 1], [], []>} : vector<8x8xf32>, vector<8x128xf32>, vector<8x128xf32> -> vector<8x128xf32>
    %c0_3 = arith.constant 0 : index
    %c0_4 = arith.constant 0 : index
    %3 = vector.load %arg3[%c0_3, %c0_4] : memref<1x128xf32, #tpu.memory_space<vmem>>, vector<1x128xf32>
    %4 = vector.broadcast %3 : vector<1x128xf32> to vector<8x128xf32>
    %5 = arith.addf %2, %4 : vector<8x128xf32>
    %cst_5 = arith.constant 0.000000e+00 : f32
    %6 = vector.broadcast %cst_5 : f32 to vector<8x128xf32>
    %7 = arith.maximumf %5, %6 : vector<8x128xf32>
    %8 = arith.truncf %7 : vector<8x128xf32> to vector<8x128xbf16>
    %c0_6 = arith.constant 0 : index
    %c0_7 = arith.constant 0 : index
    %9 = vector.load %arg4[%c0_6, %c0_7] : memref<128x128xbf16, #tpu.memory_space<vmem>>, vector<128x128xbf16>
    %cst_8 = arith.constant dense<0.000000e+00> : vector<8x128xf32>
    %10 = tpu.matmul %8, %9, %cst_8 {dimension_numbers = #tpu.dot_dimension_numbers<[1], [0], [0], [1], [0, 0, 1, 1], [], []>} : vector<8x128xbf16>, vector<128x128xbf16>, vector<8x128xf32> -> vector<8x128xf32>
    %c0_9 = arith.constant 0 : index
    %c0_10 = arith.constant 0 : index
    %11 = vector.load %arg5[%c0_9, %c0_10] : memref<1x128xf32, #tpu.memory_space<vmem>>, vector<1x128xf32>
    %12 = vector.broadcast %11 : vector<1x128xf32> to vector<8x128xf32>
    %13 = arith.addf %10, %12 : vector<8x128xf32>
    %cst_11 = arith.constant 0.000000e+00 : f32
    %14 = vector.broadcast %cst_11 : f32 to vector<8x128xf32>
    %15 = arith.maximumf %13, %14 : vector<8x128xf32>
    %16 = arith.truncf %15 : vector<8x128xf32> to vector<8x128xbf16>
    %c0_12 = arith.constant 0 : index
    %c0_13 = arith.constant 0 : index
    %17 = vector.load %arg6[%c0_12, %c0_13] : memref<128x4xbf16, #tpu.memory_space<vmem>>, vector<128x4xbf16>
    %cst_14 = arith.constant dense<0.000000e+00> : vector<8x4xf32>
    %18 = tpu.matmul %16, %17, %cst_14 {dimension_numbers = #tpu.dot_dimension_numbers<[1], [0], [0], [1], [0, 0, 1, 1], [], []>} : vector<8x128xbf16>, vector<128x4xbf16>, vector<8x4xf32> -> vector<8x4xf32>
    %c0_15 = arith.constant 0 : index
    %c0_16 = arith.constant 0 : index
    %19 = vector.load %arg7[%c0_15, %c0_16] : memref<1x4xf32, #tpu.memory_space<vmem>>, vector<1x4xf32>
    %20 = vector.broadcast %19 : vector<1x4xf32> to vector<8x4xf32>
    %21 = arith.addf %18, %20 : vector<8x4xf32>
    %cst_17 = arith.constant dense<0xFF800000> : vector<8xf32>
    %22 = vector.multi_reduction <maximumf>, %21, %cst_17 [1] : vector<8x4xf32> to vector<8xf32>
    %23 = vector.shape_cast %22 : vector<8xf32> to vector<8x1xf32>
    %24 = vector.broadcast %23 : vector<8x1xf32> to vector<8x4xf32>
    %25 = arith.subf %21, %24 : vector<8x4xf32>
    %26 = math.exp %25 : vector<8x4xf32>
    %cst_18 = arith.constant dense<0.000000e+00> : vector<8xf32>
    %27 = vector.multi_reduction <add>, %26, %cst_18 [1] : vector<8x4xf32> to vector<8xf32>
    %28 = vector.shape_cast %27 : vector<8xf32> to vector<8x1xf32>
    %29 = vector.broadcast %28 : vector<8x1xf32> to vector<8x4xf32>
    %30 = arith.divf %26, %29 : vector<8x4xf32>
    %c0_19 = arith.constant 0 : index
    %c0_20 = arith.constant 0 : index
    %31 = vector.load %arg8[%c0_19, %c0_20] : memref<8x4xf32, #tpu.memory_space<vmem>>, vector<8x4xf32>
    tpu.vector_store %arg8[%c0_19, %c0_20], %30 {strides = array<i32>} : memref<8x4xf32, #tpu.memory_space<vmem>>, vector<8x4xf32>,
    return
  }
  func.func @transform_0(%arg0: i32) -> (i32, i32) {
    %c0_i32 = arith.constant 0 : i32
    %c0_i32_0 = arith.constant 0 : i32
    return %arg0, %c0_i32 : i32, i32
  }
  func.func @transform_1(%arg0: i32) -> (i32, i32) {
    %c0_i32 = arith.constant 0 : i32
    %c0_i32_0 = arith.constant 0 : i32
    %c0_i32_1 = arith.constant 0 : i32
    return %c0_i32, %c0_i32_0 : i32, i32
  }
  func.func @transform_2(%arg0: i32) -> (i32, i32) {
    %c0_i32 = arith.constant 0 : i32
    %c0_i32_0 = arith.constant 0 : i32
    %c0_i32_1 = arith.constant 0 : i32
    return %c0_i32, %c0_i32_0 : i32, i32
  }
  func.func @transform_3(%arg0: i32) -> (i32, i32) {
    %c0_i32 = arith.constant 0 : i32
    %c0_i32_0 = arith.constant 0 : i32
    %c0_i32_1 = arith.constant 0 : i32
    return %c0_i32, %c0_i32_0 : i32, i32
  }
  func.func @transform_4(%arg0: i32) -> (i32, i32) {
    %c0_i32 = arith.constant 0 : i32
    %c0_i32_0 = arith.constant 0 : i32
    %c0_i32_1 = arith.constant 0 : i32
    return %c0_i32, %c0_i32_0 : i32, i32
  }
  func.func @transform_5(%arg0: i32) -> (i32, i32) {
    %c0_i32 = arith.constant 0 : i32
    %c0_i32_0 = arith.constant 0 : i32
    %c0_i32_1 = arith.constant 0 : i32
    return %c0_i32, %c0_i32_0 : i32, i32
  }
  func.func @transform_6(%arg0: i32) -> (i32, i32) {
    %c0_i32 = arith.constant 0 : i32
    %c0_i32_0 = arith.constant 0 : i32
    %c0_i32_1 = arith.constant 0 : i32
    return %c0_i32, %c0_i32_0 : i32, i32
  }
  func.func @transform_7(%arg0: i32) -> (i32, i32) {
    %c0_i32 = arith.constant 0 : i32
    %c0_i32_0 = arith.constant 0 : i32
    return %arg0, %c0_i32 : i32, i32
  }
}

</mosaic_0001>

<llo_original>
// kernel: policy_network_forward.1
$region0: #{policy_network_forward.1}
  #allocation0 [shape = 'u32[]', space=smem, size = 0x4, offset = 0x4, fixed_abs, tag = 'smem constant byte address 0x4 - core index']
  #allocation1 [shape = 'u32[72,128]{1,0:T(1,128)}', space=vmem, size = 0x9000, scoped, tag = 'internal scratch']
  %s0 = inlined_call_operand.vmem [shape: f32[8,8], index: 0, kind: input, shape index: {}]
  %s1 = inlined_call_operand.vmem [shape: f32[8,128], index: 1, kind: input, shape index: {}]
  %s2 = inlined_call_operand.vmem [shape: f32[1,128], index: 2, kind: input, shape index: {}]
  %s3 = inlined_call_operand.vmem [shape: bf16[128,128], index: 3, kind: input, shape index: {}]
  %s4 = inlined_call_operand.vmem [shape: f32[1,128], index: 4, kind: input, shape index: {}]
  %s5 = inlined_call_operand.vmem [shape: bf16[128,4], index: 5, kind: input, shape index: {}]
  %s6 = inlined_call_operand.vmem [shape: f32[1,4], index: 6, kind: input, shape index: {}]
  %s7 = inlined_call_operand.vmem [shape: f32[8,4], index: 7, kind: output, shape index: {}]
  %s8 = sld [smem:[#allocation0]]
  $region38: #{policy_network_forward.1} parent=0
    _
  %s10 = ssub.s32 1, %s8
  %s11 = scalar_select 0, %s10, %s8
  // Predicated region
  $region2: #{policy_network_forward.1} parent=0 // pred_check
    _
  $region3: #{policy_network_forward.1} parent=0 // pred_check_branch
    %13 = sbr.rel (0) target = $region5
  $region4: #{policy_network_forward.1} parent=0 // pred_region
    _
  $region5: #{policy_network_forward.1} parent=0 // pred_fallthru
    _
  // Predicated region
  $region6: #{policy_network_forward.1} parent=0 // pred_check
    _
  $region7: #{policy_network_forward.1} parent=0 // pred_check_branch
    %15 = sbr.rel (0) target = $region9
  $region8: #{policy_network_forward.1} parent=0 // pred_region
    _
  $region9: #{policy_network_forward.1} parent=0 // pred_fallthru
    _
  // Predicated region
  $region10: #{policy_network_forward.1} parent=0 // pred_check
    _
  $region11: #{policy_network_forward.1} parent=0 // pred_check_branch
    %17 = sbr.rel (0) target = $region13
  $region12: #{policy_network_forward.1} parent=0 // pred_region
    _
  $region13: #{policy_network_forward.1} parent=0 // pred_fallthru
    _
  // Predicated region
  $region14: #{policy_network_forward.1} parent=0 // pred_check
    _
  $region15: #{policy_network_forward.1} parent=0 // pred_check_branch
    %19 = sbr.rel (0) target = $region17
  $region16: #{policy_network_forward.1} parent=0 // pred_region
    _
  $region17: #{policy_network_forward.1} parent=0 // pred_fallthru
    _
  // Predicated region
  $region18: #{policy_network_forward.1} parent=0 // pred_check
    _
  $region19: #{policy_network_forward.1} parent=0 // pred_check_branch
    %21 = sbr.rel (0) target = $region21
  $region20: #{policy_network_forward.1} parent=0 // pred_region
    _
  $region21: #{policy_network_forward.1} parent=0 // pred_fallthru
    _
  // Predicated region
  $region22: #{policy_network_forward.1} parent=0 // pred_check
    _
  $region23: #{policy_network_forward.1} parent=0 // pred_check_branch
    %23 = sbr.rel (0) target = $region25
  $region24: #{policy_network_forward.1} parent=0 // pred_region
    _
  $region25: #{policy_network_forward.1} parent=0 // pred_fallthru
    _
  // Predicated region
  $region26: #{policy_network_forward.1} parent=0 // pred_check
    _
  $region27: #{policy_network_forward.1} parent=0 // pred_check_branch
    %25 = sbr.rel (0) target = $region29
  $region28: #{policy_network_forward.1} parent=0 // pred_region
    _
  $region29: #{policy_network_forward.1} parent=0 // pred_fallthru
    _
  %v26 = vld [vmem:[%s0] sm:$0xff]
  %v27 = vld [vmem:[%s1] sm:$0xff]
  %v28 = vld [vmem:[%s2] sm:$0x1]
  %v30 = vperm.slane %v28, 0
  %vm32 = vcmask 64512
  %v34 = vsel %vm32, %v26, 0
  %36 = vmatpush.msra.mxu0 0.0
  %37 = vmatpush.msra.mxu0 0.0
  %38 = vmatpush.msra.mxu0 0.0
  %39 = vmatpush.msra.mxu0 0.0
  %40 = vmatpush.msra.mxu0 0.0
  %41 = vmatpush.msra.mxu0 0.0
  %42 = vmatpush.msra.mxu0 0.0
  %43 = vmatpush.msra.mxu0 0.0
  %44 = vmatpush.msra.mxu0 0.0
  %45 = vmatpush.msra.mxu0 0.0
  %46 = vmatpush.msra.mxu0 0.0
  %47 = vmatpush.msra.mxu0 0.0
  %48 = vmatpush.msra.mxu0 0.0
  %49 = vmatpush.msra.mxu0 0.0
  %50 = vmatpush.msra.mxu0 0.0
  %51 = vmatpush.msra.mxu0 %v27
  %52 = vmatmul.f32.gmra.mxu0 %v34
  %v53 = vpop.f32.mrf.mxu0
  %v54 = vadd.f32 %v30, %v53
  %55 = vdwg.mxu0
  %v56 = vmax.f32 %v54, 0.0
  %v57 = vpack.c.bf16 %v56, %v56
  %v58 = vld [vmem:[%s3] sm:$0xf]
  %v59 = vld [vmem:[%s3 + $0x4] sm:$0xf]
  %v60 = vld [vmem:[%s3 + $0x8] sm:$0xf]
  %v61 = vld [vmem:[%s3 + $0xc] sm:$0xf]
  %v62 = vld [vmem:[%s3 + $0x10] sm:$0xf]
  %v63 = vld [vmem:[%s3 + $0x14] sm:$0xf]
  %v64 = vld [vmem:[%s3 + $0x18] sm:$0xf]
  %v65 = vld [vmem:[%s3 + $0x1c] sm:$0xf]
  %v66 = vld [vmem:[%s3 + $0x20] sm:$0xf]
  %v67 = vld [vmem:[%s3 + $0x24] sm:$0xf]
  %v68 = vld [vmem:[%s3 + $0x28] sm:$0xf]
  %v69 = vld [vmem:[%s3 + $0x2c] sm:$0xf]
  %v70 = vld [vmem:[%s3 + $0x30] sm:$0xf]
  %v71 = vld [vmem:[%s3 + $0x34] sm:$0xf]
  %v72 = vld [vmem:[%s3 + $0x38] sm:$0xf]
  %v73 = vld [vmem:[%s3 + $0x3c] sm:$0xf]
  %v74 = vld [vmem:[%s4] sm:$0x1]
  %v76 = vperm.slane %v74, 0
  %v94 = vunpack.c.l.b16 %v58
  %v95 = vunpack.c.l.b16 %v59
  %v96 = vunpack.c.l.b16 %v60
  %v97 = vunpack.c.l.b16 %v61
  %v98 = vunpack.c.l.b16 %v62
  %v99 = vunpack.c.l.b16 %v63
  %v100 = vunpack.c.l.b16 %v64
  %v101 = vunpack.c.l.b16 %v65
  %v102 = vunpack.c.l.b16 %v66
  %v103 = vunpack.c.l.b16 %v67
  %v104 = vunpack.c.l.b16 %v68
  %v105 = vunpack.c.l.b16 %v69
  %v106 = vunpack.c.l.b16 %v70
  %v107 = vunpack.c.l.b16 %v71
  %v108 = vunpack.c.l.b16 %v72
  %v109 = vunpack.c.l.b16 %v73
  %v110 = vpack.c.b16 %v95, %v94
  %v111 = vpack.c.b16 %v97, %v96
  %v112 = vpack.c.b16 %v99, %v98
  %v113 = vpack.c.b16 %v101, %v100
  %v114 = vpack.c.b16 %v103, %v102
  %v115 = vpack.c.b16 %v105, %v104
  %v116 = vpack.c.b16 %v107, %v106
  %v117 = vpack.c.b16 %v109, %v108
  %126 = vmatpush.bf16.msra.mxu0 %v117
  %127 = vmatpush.bf16.msra.mxu0 %v116
  %128 = vmatpush.bf16.msra.mxu0 %v115
  %129 = vmatpush.bf16.msra.mxu0 %v114
  %130 = vmatpush.bf16.msra.mxu0 %v113
  %131 = vmatpush.bf16.msra.mxu0 %v112
  %132 = vmatpush.bf16.msra.mxu0 %v111
  %133 = vmatpush.bf16.msra.mxu0 %v110
  %134 = vmatmul.bf16.gmra.mxu0 %v57
  %v135 = vpop.f32.mrf.mxu0
  %v136 = vadd.f32 %v76, %v135
  %v137 = vpop.f32.mrf.mxu0
  %138 = vdwg.mxu0
  %v139 = vmax.f32 %v136, 0.0
  %v140 = vpack.c.bf16 %v139, %v139
  %v141 = vld [vmem:[%s5] sm:$0xf]
  %v142 = vld [vmem:[%s5 + $0x4] sm:$0xf]
  %v143 = vld [vmem:[%s5 + $0x8] sm:$0xf]
  %v144 = vld [vmem:[%s5 + $0xc] sm:$0xf]
  %v145 = vld [vmem:[%s5 + $0x10] sm:$0xf]
  %v146 = vld [vmem:[%s5 + $0x14] sm:$0xf]
  %v147 = vld [vmem:[%s5 + $0x18] sm:$0xf]
  %v148 = vld [vmem:[%s5 + $0x1c] sm:$0xf]
  %v149 = vld [vmem:[%s5 + $0x20] sm:$0xf]
  %v150 = vld [vmem:[%s5 + $0x24] sm:$0xf]
  %v151 = vld [vmem:[%s5 + $0x28] sm:$0xf]
  %v152 = vld [vmem:[%s5 + $0x2c] sm:$0xf]
  %v153 = vld [vmem:[%s5 + $0x30] sm:$0xf]
  %v154 = vld [vmem:[%s5 + $0x34] sm:$0xf]
  %v155 = vld [vmem:[%s5 + $0x38] sm:$0xf]
  %v156 = vld [vmem:[%s5 + $0x3c] sm:$0xf]
  %v157 = vld [vmem:[%s6] sm:$0x1]
  %v159 = vperm.slane %v157, 0
  %v177 = vunpack.c.l.b16 %v141
  %v178 = vunpack.c.l.b16 %v142
  %v179 = vunpack.c.l.b16 %v143
  %v180 = vunpack.c.l.b16 %v144
  %v181 = vunpack.c.l.b16 %v145
  %v182 = vunpack.c.l.b16 %v146
  %v183 = vunpack.c.l.b16 %v147
  %v184 = vunpack.c.l.b16 %v148
  %v185 = vunpack.c.l.b16 %v149
  %v186 = vunpack.c.l.b16 %v150
  %v187 = vunpack.c.l.b16 %v151
  %v188 = vunpack.c.l.b16 %v152
  %v189 = vunpack.c.l.b16 %v153
  %v190 = vunpack.c.l.b16 %v154
  %v191 = vunpack.c.l.b16 %v155
  %v192 = vunpack.c.l.b16 %v156
  %v193 = vpack.c.b16 %v178, %v177
  %v194 = vpack.c.b16 %v180, %v179
  %v195 = vpack.c.b16 %v182, %v181
  %v196 = vpack.c.b16 %v184, %v183
  %v197 = vpack.c.b16 %v186, %v185
  %v198 = vpack.c.b16 %v188, %v187
  %v199 = vpack.c.b16 %v190, %v189
  %v200 = vpack.c.b16 %v192, %v191
  %209 = vmatpush.bf16.msra.mxu0 %v200
  %210 = vmatpush.bf16.msra.mxu0 %v199
  %211 = vmatpush.bf16.msra.mxu0 %v198
  %212 = vmatpush.bf16.msra.mxu0 %v197
  %213 = vmatpush.bf16.msra.mxu0 %v196
  %214 = vmatpush.bf16.msra.mxu0 %v195
  %215 = vmatpush.bf16.msra.mxu0 %v194
  %216 = vmatpush.bf16.msra.mxu0 %v193
  %217 = vmatmul.bf16.gmra.mxu0 %v140
  %v218 = vpop.f32.mrf.mxu0
  %v219 = vadd.f32 %v159, %v218
  %v220 = vpop.f32.mrf.mxu0
  %221 = vdwg.mxu0
  %vm222 = vcmask 31744
  %v223 = vsel %vm222, %v219, -inf
  %224 = vmax.xlane.f32.xlu0 %v223
  %v225 = vpop.xlane.xlu0 %224
  %v226 = vsub.f32 %v219, %v225
  %v227 = vmul.f32 %v226, 1.442695
  %v228 = vpow.pop %v227
  %v229 = vsel %vm222, %v228, 0.0
  %230 = vadd.xlane.f32.xlu0 %v229
  %v231 = vpop.xlane.xlu0 %230
  %v232 = vrcp.pop %v231
  %v233 = vmul.f32 %v231, %v232
  %v234 = vsub.f32 1.0, %v233
  %v235 = vmul.f32 %v232, %v234
  %v236 = vadd.f32 %v232, %v235
  %vm237 = vweird.f32 %v231
  %vm238 = vweird.f32 %v232
  %vm239 = vmor %vm237, %vm238
  %v240 = vsel %vm239, %v232, %v236
  %v241 = vand.u32 2147483647, %v231
  %vm242 = vcmp.eq.f32.partialorder %v241, 8.507059e+37
  %v243 = vand.u32 %v231, 2147483648
  %v244 = vor.u32 1.1754944e-38, %v243
  %v245 = vsel %vm242, %v244, %v240
  %v246 = vmul.f32 %v228, %v245
  %247 = vst.msk [vmem:[%s7] sm:$0xff] %vm222, %v246
  // Predicated region
  $region30: #{policy_network_forward.1} parent=0 // pred_check
    _
  $region31: #{policy_network_forward.1} parent=0 // pred_check_branch
    %249 = sbr.rel (0) target = $region33
  $region32: #{policy_network_forward.1} parent=0 // pred_region
    _
  $region33: #{policy_network_forward.1} parent=0 // pred_fallthru
    _
  // Predicated region
  $region34: #{policy_network_forward.1} parent=0 // pred_check
    _
  $region35: #{policy_network_forward.1} parent=0 // pred_check_branch
    %251 = sbr.rel (0) target = $region37
  $region36: #{policy_network_forward.1} parent=0 // pred_region
    _
  $region37: #{policy_network_forward.1} parent=0 // pred_fallthru
    _

</llo_original>
